<compile_context>
chip_gen: v7x
topology: tpu7x:2x2x1
jax: 0.10.0
libtpu: 0.0.40
codegen_flags: <defaults>
</compile_context>

<pallas_src>
import math
import numpy as np
import jax
import jax.numpy as jnp
from jax import lax
from jax.experimental import pallas as pl
from jax.experimental.pallas import tpu as pltpu


def _lv_kernel(x_ref, w2_ref, w3t_ref, pack_ref, mask_ref, o_ref):
    """One grid step processes a lane-dense (1, W) slab of nb packed samples.

    x_ref    : (1, 1, W)  input samples packed along the lane axis
    w2_ref   : (3, C, C)  conv1d_2 taps, w2_ref[k][o][i] = w2[o, i, k]
    w3t_ref  : (8, C)     mean-folded conv1d_3 taps (rows 5..7 zero pad)
    pack_ref : (C, 8)     [w1, b1, b2, b3_mean, w4_mean, b4_mean, 0, 0]
    mask_ref : (8, W)     hoisted per-lane constants (tap validity / selector)
    o_ref    : (1, 1, W)  output slab
    """
    f32 = jnp.float32
    xs = x_ref[0]                              # (1, W)
    W = xs.shape[1]

    mk = mask_ref[...]                         # constant, resident
    mL1 = mk[0:1, :]                           # p >= 1        (tap d=-1 valid)
    mL2 = mk[1:2, :]                           # p >= 2        (tap d=-2 valid)
    mR1 = mk[2:3, :]                           # p <  L1 - 1   (tap d=+1 valid)
    mR2 = mk[3:4, :]                           # p <  L1 - 2   (tap d=+2 valid)
    sel = mk[4:5, :]                           # p <  L1       (x1 half)

    pk = pack_ref[...]                         # (C, 8)
    w1 = pk[:, 0:1]                            # (C, 1)
    b1 = pk[:, 1:2]
    b2 = pk[:, 2:3]
    b3m = pk[0:1, 3:4]                         # (1, 1) scalars
    w4m = pk[0:1, 4:5]
    b4m = pk[0:1, 5:6]

    # ---- conv1d_1 (1->C, k=1): per-channel scale + bias ------------------
    y = w1 * xs + b1                           # (C, W)

    # ---- conv1d_2 (C->C, k=3, pad=1): three accumulating MXU dots --------
    # Masks realize the zero padding per sample / per x1 chunk (taps must not
    # leak across the x1|x2 split or across packed samples).
    y_m1 = pltpu.roll(y, 1, axis=1) * mL1      # y[:, l-1]
    y_p1 = pltpu.roll(y, W - 1, axis=1) * mR1  # y[:, l+1]
    z = (jnp.dot(w2_ref[0], y_m1, preferred_element_type=f32)
         + jnp.dot(w2_ref[1], y, preferred_element_type=f32)
         + jnp.dot(w2_ref[2], y_p1, preferred_element_type=f32)
         + b2)                                 # (C, W)

    # ---- conv1d_3 (k=5, pad=2) + channel-mean (mean precomposed) ---------
    # T[k, l] = mean_o(w3)[., k] . z[:, l]; taps combined with lane rolls.
    T = jnp.dot(w3t_ref[...], z, preferred_element_type=f32)   # (8, W)
    m1 = b3m + T[2:3, :]                                        # center tap
    m1 = m1 + pltpu.roll(T[0:1, :], 2, axis=1) * mL2
    m1 = m1 + pltpu.roll(T[1:2, :], 1, axis=1) * mL1
    m1 = m1 + pltpu.roll(T[3:4, :], W - 1, axis=1) * mR1
    m1 = m1 + pltpu.roll(T[4:5, :], W - 2, axis=1) * mR2

    # ---- conv1d_4 (1->C, k=1) + channel-mean: scalar affine map ----------
    m2 = w4m * xs + b4m                        # (1, W)

    # Single lane-dense slab store; sel is a {0,1} blend mask.
    o_ref[0] = sel * m1 + (1.0 - sel) * m2


def lv_forward(x, params):
    B, cin, L = x.shape
    assert cin == 1, "LV expects a single input channel"
    w1, b1, w2, b2, w3, b3, w4, b4 = params
    C = w2.shape[0]
    L1 = (L + 1) // 2                          # torch.chunk split point
    f32 = jnp.float32
    x = x.astype(f32)

    # ---- lane-dense tiling: W = nb*L is always a multiple of 128 ----------
    nb_unit = 128 // math.gcd(L, 128)          # smallest nb with (nb*L) % 128 == 0
    lane_target = 1024                         # ~1K lanes per grid step
    units_target = max(1, lane_target // (nb_unit * L))
    units_in_batch = max(1, -(-B // nb_unit))  # ceil(B / nb_unit)
    units = min(units_target, units_in_batch)  # don't inflate tiny batches
    if units_in_batch >= 2:                    # keep G >= 2 when batch allows
        units = max(1, min(units, units_in_batch // 2))
    nb = nb_unit * units
    W = nb * L
    B_pad = -(-B // nb) * nb
    G = B_pad // nb
    if B_pad != B:                             # zero-pad batch tail, sliced off later
        x = jnp.concatenate([x, jnp.zeros((B_pad - B, 1, L), f32)], axis=0)
    x_rs = x.reshape(G, 1, W)                  # free reshape

    # ---- weight preparation (all precompositions are mathematically exact;
    #      the module is purely affine between the convs and the mean) ------
    w1c = w1.reshape(C).astype(f32)
    b1c = b1.reshape(C).astype(f32)
    b2c = b2.reshape(C).astype(f32)
    w2stk = jnp.transpose(w2.astype(f32), (2, 0, 1))          # (3, C, C)
    w3m = jnp.mean(w3.astype(f32), axis=0)                    # (C, 5)
    w3t = jnp.zeros((8, C), f32).at[:5, :].set(w3m.T)         # (8, C), 3 pad rows
    b3m = jnp.mean(b3.astype(f32))
    w4m = jnp.mean(w4.astype(f32))
    b4m = jnp.mean(b4.astype(f32))

    pack = jnp.zeros((C, 8), f32)
    pack = pack.at[:, 0].set(w1c).at[:, 1].set(b1c).at[:, 2].set(b2c)
    pack = pack.at[:, 3].set(b3m).at[:, 4].set(w4m).at[:, 5].set(b4m)

    # ---- hoisted per-lane constants (built once at trace time) ------------
    p = np.arange(W) % L                       # position of each lane in its sample
    masks = np.zeros((8, W), np.float32)
    masks[0] = p >= 1
    masks[1] = p >= 2
    masks[2] = p < (L1 - 1)
    masks[3] = p < (L1 - 2)
    masks[4] = p < L1
    masks = jnp.asarray(masks)

    out = pl.pallas_call(
        _lv_kernel,
        out_shape=jax.ShapeDtypeStruct((G, 1, W), f32),
        grid=(G,),
        in_specs=[
            pl.BlockSpec((1, 1, W), lambda g: (g, 0, 0)),
            pl.BlockSpec((3, C, C), lambda g: (0, 0, 0)),
            pl.BlockSpec((8, C), lambda g: (0, 0)),
            pl.BlockSpec((C, 8), lambda g: (0, 0)),
            pl.BlockSpec((8, W), lambda g: (0, 0)),
        ],
        out_specs=pl.BlockSpec((1, 1, W), lambda g: (g, 0, 0)),
        compiler_params=pltpu.CompilerParams(
            dimension_semantics=("parallel",)),
    )(x_rs, w2stk, w3t, pack, masks)
    return out.reshape(B_pad, 1, L)[:B]


# ---------------- pure-JAX reference (for correctness check) ----------------
def conv1d_ref(x, w, b, pad):
    out = lax.conv_general_dilated(
        x, w, window_strides=(1,), padding=[(pad, pad)],
        dimension_numbers=('NCH', 'OIH', 'NCH'))
    return out + b[None, :, None]


def lv_reference(x, params):
    w1, b1, w2, b2, w3, b3, w4, b4 = params
    L = x.shape[2]
    L1 = (L + 1) // 2
    x1, x2 = x[:, :, :L1], x[:, :, L1:]
    x1 = conv1d_ref(x1, w1, b1, 0)
    x1 = conv1d_ref(x1, w2, b2, 1)
    x1 = conv1d_ref(x1, w3, b3, 2)
    x2 = conv1d_ref(x2, w4, b4, 0)
    out = jnp.concatenate([x1, x2], axis=2)
    return jnp.mean(out, axis=1, keepdims=True)


if __name__ == "__main__":
    key = jax.random.PRNGKey(0)
    B, bands, out_channels = 2, 64, 64
    C = out_channels // 2                                    # 32

    ks = jax.random.split(key, 9)
    x = jax.random.normal(ks[0], (B, 1, bands), jnp.float32)
    # Deterministic synthetic parameters (shapes from nn.Conv1d in __init__).
    w1 = 0.3 * jax.random.normal(ks[1], (C, 1, 1), jnp.float32)
    b1 = 0.1 * jax.random.normal(ks[2], (C,), jnp.float32)
    w2 = 0.2 * jax.random.normal(ks[3], (C, C, 3), jnp.float32)
    b2 = 0.1 * jax.random.normal(ks[4], (C,), jnp.float32)
    w3 = 0.2 * jax.random.normal(ks[5], (C, C, 5), jnp.float32)
    b3 = 0.1 * jax.random.normal(ks[6], (C,), jnp.float32)
    w4 = 0.3 * jax.random.normal(ks[7], (C, 1, 1), jnp.float32)
    b4 = 0.1 * jax.random.normal(ks[8], (C,), jnp.float32)
    params = (w1, b1, w2, b2, w3, b3, w4, b4)

    out = jax.block_until_ready(lv_forward(x, params))
    ref = jax.block_until_ready(lv_reference(x, params))

    assert out.shape == (B, 1, bands), out.shape
    np.testing.assert_allclose(np.asarray(out), np.asarray(ref),
                               rtol=1e-3, atol=1e-3)
    print("KERNEL_OK")
</pallas_src>

<mosaic_0001>
module attributes {stable_mosaic.version = 11 : i64} {
  func.func @_lv_kernel(%arg0: i32, %arg1: memref<1x1x128xf32, #tpu.memory_space<vmem>>, %arg2: memref<3x32x32xf32, #tpu.memory_space<vmem>>, %arg3: memref<8x32xf32, #tpu.memory_space<vmem>>, %arg4: memref<32x8xf32, #tpu.memory_space<vmem>>, %arg5: memref<8x128xf32, #tpu.memory_space<vmem>>, %arg6: memref<1x1x128xf32, #tpu.memory_space<vmem>>) attributes {dimension_semantics = [#tpu.dimension_semantics<parallel>], iteration_bounds = array<i64: 1>, scalar_prefetch = 0 : i64, scratch_operands = 0 : i64, tpu.core_type = #tpu.core_type<tc>, window_params = [{transform_indices = @transform_0, window_bounds = array<i64: 1, 1, 128>}, {pipeline_mode = #tpu.pipeline_mode<synchronous>, transform_indices = @transform_1, window_bounds = array<i64: 3, 32, 32>}, {pipeline_mode = #tpu.pipeline_mode<synchronous>, transform_indices = @transform_2, window_bounds = array<i64: 8, 32>}, {pipeline_mode = #tpu.pipeline_mode<synchronous>, transform_indices = @transform_3, window_bounds = array<i64: 32, 8>}, {pipeline_mode = #tpu.pipeline_mode<synchronous>, transform_indices = @transform_4, window_bounds = array<i64: 8, 128>}, {transform_indices = @transform_5, window_bounds = array<i64: 1, 1, 128>}]} {
    %c0 = arith.constant 0 : index
    %c0_0 = arith.constant 0 : index
    %c0_1 = arith.constant 0 : index
    %0 = vector.load %arg1[%c0, %c0_0, %c0_1] : memref<1x1x128xf32, #tpu.memory_space<vmem>>, vector<1x1x128xf32>
    %1 = vector.shape_cast %0 : vector<1x1x128xf32> to vector<1x128xf32>
    %c0_2 = arith.constant 0 : index
    %c0_3 = arith.constant 0 : index
    %2 = vector.load %arg5[%c0_2, %c0_3] : memref<8x128xf32, #tpu.memory_space<vmem>>, vector<8x128xf32>
    %3 = vector.extract_strided_slice %2 {offsets = [0, 0], sizes = [1, 128], strides = [1, 1]} : vector<8x128xf32> to vector<1x128xf32>
    %4 = vector.extract_strided_slice %2 {offsets = [1, 0], sizes = [1, 128], strides = [1, 1]} : vector<8x128xf32> to vector<1x128xf32>
    %5 = vector.extract_strided_slice %2 {offsets = [2, 0], sizes = [1, 128], strides = [1, 1]} : vector<8x128xf32> to vector<1x128xf32>
    %6 = vector.extract_strided_slice %2 {offsets = [3, 0], sizes = [1, 128], strides = [1, 1]} : vector<8x128xf32> to vector<1x128xf32>
    %7 = vector.extract_strided_slice %2 {offsets = [4, 0], sizes = [1, 128], strides = [1, 1]} : vector<8x128xf32> to vector<1x128xf32>
    %c0_4 = arith.constant 0 : index
    %c0_5 = arith.constant 0 : index
    %8 = vector.load %arg4[%c0_4, %c0_5] : memref<32x8xf32, #tpu.memory_space<vmem>>, vector<32x8xf32>
    %9 = vector.extract_strided_slice %8 {offsets = [0, 0], sizes = [32, 1], strides = [1, 1]} : vector<32x8xf32> to vector<32x1xf32>
    %10 = vector.extract_strided_slice %8 {offsets = [0, 1], sizes = [32, 1], strides = [1, 1]} : vector<32x8xf32> to vector<32x1xf32>
    %11 = vector.extract_strided_slice %8 {offsets = [0, 2], sizes = [32, 1], strides = [1, 1]} : vector<32x8xf32> to vector<32x1xf32>
    %12 = vector.extract_strided_slice %8 {offsets = [0, 3], sizes = [1, 1], strides = [1, 1]} : vector<32x8xf32> to vector<1x1xf32>
    %13 = vector.extract_strided_slice %8 {offsets = [0, 4], sizes = [1, 1], strides = [1, 1]} : vector<32x8xf32> to vector<1x1xf32>
    %14 = vector.extract_strided_slice %8 {offsets = [0, 5], sizes = [1, 1], strides = [1, 1]} : vector<32x8xf32> to vector<1x1xf32>
    %15 = vector.broadcast %9 : vector<32x1xf32> to vector<32x128xf32>
    %16 = vector.broadcast %1 : vector<1x128xf32> to vector<32x128xf32>
    %17 = arith.mulf %15, %16 : vector<32x128xf32>
    %18 = vector.broadcast %10 : vector<32x1xf32> to vector<32x128xf32>
    %19 = arith.addf %17, %18 : vector<32x128xf32>
    %c1_i32 = arith.constant 1 : i32
    %20 = tpu.dynamic_rotate %19 by %c1_i32 dim 1 : vector<32x128xf32>, i32 -> vector<32x128xf32>
    %21 = vector.broadcast %3 : vector<1x128xf32> to vector<32x128xf32>
    %22 = arith.mulf %20, %21 : vector<32x128xf32>
    %c127_i32 = arith.constant 127 : i32
    %23 = tpu.dynamic_rotate %19 by %c127_i32 dim 1 : vector<32x128xf32>, i32 -> vector<32x128xf32>
    %24 = vector.broadcast %5 : vector<1x128xf32> to vector<32x128xf32>
    %25 = arith.mulf %23, %24 : vector<32x128xf32>
    %c0_6 = arith.constant 0 : index
    %c0_7 = arith.constant 0 : index
    %c0_8 = arith.constant 0 : index
    %26 = vector.load %arg2[%c0_6, %c0_7, %c0_8] : memref<3x32x32xf32, #tpu.memory_space<vmem>>, vector<1x32x32xf32>
    %27 = vector.shape_cast %26 : vector<1x32x32xf32> to vector<32x32xf32>
    %cst = arith.constant dense<0.000000e+00> : vector<32x128xf32>
    %28 = tpu.matmul %27, %22, %cst {dimension_numbers = #tpu.dot_dimension_numbers<[1], [0], [0], [1], [0, 0, 1, 1], [], []>} : vector<32x32xf32>, vector<32x128xf32>, vector<32x128xf32> -> vector<32x128xf32>
    %c1 = arith.constant 1 : index
    %c0_9 = arith.constant 0 : index
    %c0_10 = arith.constant 0 : index
    %29 = vector.load %arg2[%c1, %c0_9, %c0_10] : memref<3x32x32xf32, #tpu.memory_space<vmem>>, vector<1x32x32xf32>
    %30 = vector.shape_cast %29 : vector<1x32x32xf32> to vector<32x32xf32>
    %cst_11 = arith.constant dense<0.000000e+00> : vector<32x128xf32>
    %31 = tpu.matmul %30, %19, %cst_11 {dimension_numbers = #tpu.dot_dimension_numbers<[1], [0], [0], [1], [0, 0, 1, 1], [], []>} : vector<32x32xf32>, vector<32x128xf32>, vector<32x128xf32> -> vector<32x128xf32>
    %32 = arith.addf %28, %31 : vector<32x128xf32>
    %c2 = arith.constant 2 : index
    %c0_12 = arith.constant 0 : index
    %c0_13 = arith.constant 0 : index
    %33 = vector.load %arg2[%c2, %c0_12, %c0_13] : memref<3x32x32xf32, #tpu.memory_space<vmem>>, vector<1x32x32xf32>
    %34 = vector.shape_cast %33 : vector<1x32x32xf32> to vector<32x32xf32>
    %cst_14 = arith.constant dense<0.000000e+00> : vector<32x128xf32>
    %35 = tpu.matmul %34, %25, %cst_14 {dimension_numbers = #tpu.dot_dimension_numbers<[1], [0], [0], [1], [0, 0, 1, 1], [], []>} : vector<32x32xf32>, vector<32x128xf32>, vector<32x128xf32> -> vector<32x128xf32>
    %36 = arith.addf %32, %35 : vector<32x128xf32>
    %37 = vector.broadcast %11 : vector<32x1xf32> to vector<32x128xf32>
    %38 = arith.addf %36, %37 : vector<32x128xf32>
    %c0_15 = arith.constant 0 : index
    %c0_16 = arith.constant 0 : index
    %39 = vector.load %arg3[%c0_15, %c0_16] : memref<8x32xf32, #tpu.memory_space<vmem>>, vector<8x32xf32>
    %cst_17 = arith.constant dense<0.000000e+00> : vector<8x128xf32>
    %40 = tpu.matmul %39, %38, %cst_17 {dimension_numbers = #tpu.dot_dimension_numbers<[1], [0], [0], [1], [0, 0, 1, 1], [], []>} : vector<8x32xf32>, vector<32x128xf32>, vector<8x128xf32> -> vector<8x128xf32>
    %41 = vector.extract_strided_slice %40 {offsets = [2, 0], sizes = [1, 128], strides = [1, 1]} : vector<8x128xf32> to vector<1x128xf32>
    %42 = vector.broadcast %12 : vector<1x1xf32> to vector<1x128xf32>
    %43 = arith.addf %42, %41 : vector<1x128xf32>
    %44 = vector.extract_strided_slice %40 {offsets = [0, 0], sizes = [1, 128], strides = [1, 1]} : vector<8x128xf32> to vector<1x128xf32>
    %c2_i32 = arith.constant 2 : i32
    %45 = tpu.dynamic_rotate %44 by %c2_i32 dim 1 : vector<1x128xf32>, i32 -> vector<1x128xf32>
    %46 = arith.mulf %45, %4 : vector<1x128xf32>
    %47 = arith.addf %43, %46 : vector<1x128xf32>
    %48 = vector.extract_strided_slice %40 {offsets = [1, 0], sizes = [1, 128], strides = [1, 1]} : vector<8x128xf32> to vector<1x128xf32>
    %c1_i32_18 = arith.constant 1 : i32
    %49 = tpu.dynamic_rotate %48 by %c1_i32_18 dim 1 : vector<1x128xf32>, i32 -> vector<1x128xf32>
    %50 = arith.mulf %49, %3 : vector<1x128xf32>
    %51 = arith.addf %47, %50 : vector<1x128xf32>
    %52 = vector.extract_strided_slice %40 {offsets = [3, 0], sizes = [1, 128], strides = [1, 1]} : vector<8x128xf32> to vector<1x128xf32>
    %c127_i32_19 = arith.constant 127 : i32
    %53 = tpu.dynamic_rotate %52 by %c127_i32_19 dim 1 : vector<1x128xf32>, i32 -> vector<1x128xf32>
    %54 = arith.mulf %53, %5 : vector<1x128xf32>
    %55 = arith.addf %51, %54 : vector<1x128xf32>
    %56 = vector.extract_strided_slice %40 {offsets = [4, 0], sizes = [1, 128], strides = [1, 1]} : vector<8x128xf32> to vector<1x128xf32>
    %c126_i32 = arith.constant 126 : i32
    %57 = tpu.dynamic_rotate %56 by %c126_i32 dim 1 : vector<1x128xf32>, i32 -> vector<1x128xf32>
    %58 = arith.mulf %57, %6 : vector<1x128xf32>
    %59 = arith.addf %55, %58 : vector<1x128xf32>
    %60 = vector.broadcast %13 : vector<1x1xf32> to vector<1x128xf32>
    %61 = arith.mulf %60, %1 : vector<1x128xf32>
    %62 = vector.broadcast %14 : vector<1x1xf32> to vector<1x128xf32>
    %63 = arith.addf %61, %62 : vector<1x128xf32>
    %64 = arith.mulf %7, %59 : vector<1x128xf32>
    %cst_20 = arith.constant 1.000000e+00 : f32
    %65 = vector.broadcast %cst_20 : f32 to vector<1x128xf32>
    %66 = arith.subf %65, %7 : vector<1x128xf32>
    %67 = arith.mulf %66, %63 : vector<1x128xf32>
    %68 = arith.addf %64, %67 : vector<1x128xf32>
    %c0_21 = arith.constant 0 : index
    %c0_22 = arith.constant 0 : index
    %c0_23 = arith.constant 0 : index
    %69 = vector.load %arg6[%c0_21, %c0_22, %c0_23] : memref<1x1x128xf32, #tpu.memory_space<vmem>>, vector<1x1x128xf32>
    %70 = vector.shape_cast %69 : vector<1x1x128xf32> to vector<1x128xf32>
    %71 = vector.shape_cast %68 : vector<1x128xf32> to vector<1x1x128xf32>
    tpu.vector_store %arg6[%c0_21, %c0_22, %c0_23], %71 {strides = array<i32>} : memref<1x1x128xf32, #tpu.memory_space<vmem>>, vector<1x1x128xf32>,
    return
  }
  func.func @transform_0(%arg0: i32) -> (i32, i32, i32) {
    %c0_i32 = arith.constant 0 : i32
    %c0_i32_0 = arith.constant 0 : i32
    %c0_i32_1 = arith.constant 0 : i32
    return %arg0, %c0_i32, %c0_i32_0 : i32, i32, i32
  }
  func.func @transform_1(%arg0: i32) -> (i32, i32, i32) {
    %c0_i32 = arith.constant 0 : i32
    %c0_i32_0 = arith.constant 0 : i32
    %c0_i32_1 = arith.constant 0 : i32
    %c0_i32_2 = arith.constant 0 : i32
    return %c0_i32, %c0_i32_0, %c0_i32_1 : i32, i32, i32
  }
  func.func @transform_2(%arg0: i32) -> (i32, i32) {
    %c0_i32 = arith.constant 0 : i32
    %c0_i32_0 = arith.constant 0 : i32
    %c0_i32_1 = arith.constant 0 : i32
    return %c0_i32, %c0_i32_0 : i32, i32
  }
  func.func @transform_3(%arg0: i32) -> (i32, i32) {
    %c0_i32 = arith.constant 0 : i32
    %c0_i32_0 = arith.constant 0 : i32
    %c0_i32_1 = arith.constant 0 : i32
    return %c0_i32, %c0_i32_0 : i32, i32
  }
  func.func @transform_4(%arg0: i32) -> (i32, i32) {
    %c0_i32 = arith.constant 0 : i32
    %c0_i32_0 = arith.constant 0 : i32
    %c0_i32_1 = arith.constant 0 : i32
    return %c0_i32, %c0_i32_0 : i32, i32
  }
  func.func @transform_5(%arg0: i32) -> (i32, i32, i32) {
    %c0_i32 = arith.constant 0 : i32
    %c0_i32_0 = arith.constant 0 : i32
    %c0_i32_1 = arith.constant 0 : i32
    return %arg0, %c0_i32, %c0_i32_0 : i32, i32, i32
  }
}

</mosaic_0001>

<llo_original>
// kernel: tpu_custom_call.1
$region0: #{tpu_custom_call.1}
  #allocation0 [shape = 'u32[]', space=smem, size = 0x4, offset = 0x4, fixed_abs, tag = 'smem constant byte address 0x4 - core index']
  #allocation1 [shape = 'u32[144,128]{1,0:T(1,128)}', space=vmem, size = 0x12000, scoped, tag = 'internal scratch']
  %s0 = inlined_call_operand.vmem [shape: f32[1,1,128], index: 0, kind: input, shape index: {}]
  %s1 = inlined_call_operand.hbm [shape: f32[3,32,32], index: 1, kind: input, shape index: {}]
  %s2 = inlined_call_operand.vmem [shape: f32[8,32], index: 2, kind: input, shape index: {}]
  %s3 = inlined_call_operand.vmem [shape: f32[32,8], index: 3, kind: input, shape index: {}]
  %s4 = inlined_call_operand.vmem [shape: f32[8,128], index: 4, kind: input, shape index: {}]
  %s5 = inlined_call_operand.hbm [shape: f32[1,1,128], index: 5, kind: output, shape index: {}]
  %s6 = sld [smem:[#allocation0]]
  $region34: #{tpu_custom_call.1} parent=0
    _
  %s8 = ssub.s32 1, %s6
  %s9 = scalar_select 0, %s8, %s6
  $region1: #{tpu_custom_call.1} parent=0
    #allocation2 [shape = 'u8[49152]{0}', space=vmem, size = 0xc000, scoped, tag = 'input window, operand 1, single buffered']
    #allocation3 [shape = 's32[1]{0}', space=sflag, size = 0x4, scoped, tag = 'scoped memory for tpu_custom_call.1']
    #allocation4 [shape = 's32[1]{0}', space=sflag, size = 0x4, scoped, tag = 'scoped memory for tpu_custom_call.1']
    #allocation5 [shape = 'u8[512]{0}', space=vmem, size = 0x400, scoped, tag = 'output window, operand 0, single buffered']
    %10 = vsyncpa [#allocation3], 0
    %11 = vsyncpa [#allocation4], 0
    // Predicated region
    $region2: #{tpu_custom_call.1} parent=1 // pred_check
      _
    $region3: #{tpu_custom_call.1} parent=1 // pred_check_branch
      %13 = sbr.rel (0) target = $region5
    $region4: #{tpu_custom_call.1} parent=1 // pred_region
      _
    $region5: #{tpu_custom_call.1} parent=1 // pred_fallthru
      _
    // Predicated region
    $region6: #{tpu_custom_call.1} parent=1 // pred_check
      _
    $region7: #{tpu_custom_call.1} parent=1 // pred_check_branch
      %15 = sbr.rel (0) target = $region9
    $region8: #{tpu_custom_call.1} parent=1 // pred_region
      %s17 = ssub.s32 1536, 1536
      %18 = vsyncadd [#allocation3], %s17
      %s19 = sshll.u32 [#allocation2], 4
      %s20 = int_to_ptr.vmem [resolvable:$true] %s19
      %25 = dma.hbm_to_vmem [thread:$0]  %s1, 1536, %s20, [#allocation3], 128, 128, 8
    $region9: #{tpu_custom_call.1} parent=1 // pred_fallthru
      _
    // Predicated region
    $region10: #{tpu_custom_call.1} parent=1 // pred_check
      _
    $region11: #{tpu_custom_call.1} parent=1 // pred_check_branch
      %27 = sbr.rel (0) target = $region13
    $region12: #{tpu_custom_call.1} parent=1 // pred_region
      _
    $region13: #{tpu_custom_call.1} parent=1 // pred_fallthru
      _
    // Predicated region
    $region14: #{tpu_custom_call.1} parent=1 // pred_check
      _
    $region15: #{tpu_custom_call.1} parent=1 // pred_check_branch
      %29 = sbr.rel (0) target = $region17
    $region16: #{tpu_custom_call.1} parent=1 // pred_region
      _
    $region17: #{tpu_custom_call.1} parent=1 // pred_fallthru
      _
    // Predicated region
    $region18: #{tpu_custom_call.1} parent=1 // pred_check
      _
    $region19: #{tpu_custom_call.1} parent=1 // pred_check_branch
      %31 = sbr.rel (0) target = $region21
    $region20: #{tpu_custom_call.1} parent=1 // pred_region
      _
    $region21: #{tpu_custom_call.1} parent=1 // pred_fallthru
      _
    // Predicated region
    $region22: #{tpu_custom_call.1} parent=1 // pred_check
      _
    $region23: #{tpu_custom_call.1} parent=1 // pred_check_branch
      %33 = sbr.rel (0) target = $region25
    $region24: #{tpu_custom_call.1} parent=1 // pred_region
      %34 = dma.done [#allocation3], 1536
    $region25: #{tpu_custom_call.1} parent=1 // pred_fallthru
      _
    %v35 = vld [vmem:[%s0] sm:$0x1]
    %v36 = vld [vmem:[%s4] sm:$0xff]
    %v37 = vld [vmem:[%s3] sm:$0xff]
    %v38 = vld [vmem:[%s3 + $0x8] sm:$0xff]
    %v39 = vld [vmem:[%s3 + $0x10] sm:$0xff]
    %v40 = vld [vmem:[%s3 + $0x18] sm:$0xff]
    %42 = vset.pattern.permute.xlu0 0
    %43 = vperm.xlu0 %42, %v37
    %v44 = vpop.permute.xlu0 %43
    %47 = vset.pattern.permute.xlu0 0
    %48 = vperm.xlu0 %47, %v38
    %v49 = vpop.permute.xlu0 %48
    %52 = vset.pattern.permute.xlu0 0
    %53 = vperm.xlu0 %52, %v39
    %v54 = vpop.permute.xlu0 %53
    %57 = vset.pattern.permute.xlu0 0
    %58 = vperm.xlu0 %57, %v40
    %v59 = vpop.permute.xlu0 %58
    %v62 = vlaneseq
    %v63 = vshrl.u32 %v62, 7
    %v64 = vsub.s32 0, %v63
    %v65 = vrot.slane %v35, %v64
    %v67 = vmul.f32 %v44, %v65
    %v68 = vmul.f32 %v49, %v65
    %v69 = vmul.f32 %v54, %v65
    %v70 = vmul.f32 %v59, %v65
    %71 = vset.pattern.permute.xlu0 1
    %72 = vperm.xlu0 %71, %v37
    %v73 = vpop.permute.xlu0 %72
    %75 = vset.pattern.permute.xlu0 1
    %76 = vperm.xlu0 %75, %v38
    %v77 = vpop.permute.xlu0 %76
    %79 = vset.pattern.permute.xlu0 1
    %80 = vperm.xlu0 %79, %v39
    %v81 = vpop.permute.xlu0 %80
    %83 = vset.pattern.permute.xlu0 1
    %84 = vperm.xlu0 %83, %v40
    %v85 = vpop.permute.xlu0 %84
    %v87 = vadd.f32 %v67, %v73
    %v88 = vadd.f32 %v68, %v77
    %v89 = vadd.f32 %v69, %v81
    %v90 = vadd.f32 %v70, %v85
    %91 = vrot.lane.b32.xlu0 %v87, 1
    %v92 = vpop.permute.xlu0 %91
    %93 = vrot.lane.b32.xlu0 %v88, 1
    %v94 = vpop.permute.xlu0 %93
    %95 = vrot.lane.b32.xlu0 %v89, 1
    %v96 = vpop.permute.xlu0 %95
    %97 = vrot.lane.b32.xlu0 %v90, 1
    %v98 = vpop.permute.xlu0 %97
    %v99 = vlaneseq
    %v100 = vshrl.u32 %v99, 7
    %v101 = vsub.s32 0, %v100
    %v102 = vrot.slane %v36, %v101
    %v103 = vmul.f32 %v92, %v102
    %v104 = vmul.f32 %v94, %v102
    %v105 = vmul.f32 %v96, %v102
    %v106 = vmul.f32 %v98, %v102
    %107 = vrot.lane.b32.xlu0 %v87, 127
    %v108 = vpop.permute.xlu0 %107
    %109 = vrot.lane.b32.xlu0 %v88, 127
    %v110 = vpop.permute.xlu0 %109
    %111 = vrot.lane.b32.xlu0 %v89, 127
    %v112 = vpop.permute.xlu0 %111
    %113 = vrot.lane.b32.xlu0 %v90, 127
    %v114 = vpop.permute.xlu0 %113
    %v115 = vlaneseq
    %v116 = vshrl.u32 %v115, 7
    %v117 = vsub.s32 2, %v116
    %v118 = vrot.slane %v36, %v117
    %v119 = vmul.f32 %v108, %v118
    %v120 = vmul.f32 %v110, %v118
    %v121 = vmul.f32 %v112, %v118
    %v122 = vmul.f32 %v114, %v118
    %v123 = vld [vmem:[#allocation2] sm:$0xff]
    %v124 = vld [vmem:[#allocation2 + $0x8] sm:$0xff]
    %v125 = vld [vmem:[#allocation2 + $0x10] sm:$0xff]
    %v126 = vld [vmem:[#allocation2 + $0x18] sm:$0xff]
    %s127 = scalar_lea.vmem [#allocation2], 32
    %v128 = vld [vmem:[%s127] sm:$0xff]
    %v129 = vld [vmem:[%s127 + $0x8] sm:$0xff]
    %v130 = vld [vmem:[%s127 + $0x10] sm:$0xff]
    %v131 = vld [vmem:[%s127 + $0x18] sm:$0xff]
    %vm132 = vcmask 261120
    %v134 = vsel %vm132, %v128, 0
    %v137 = vsel %vm132, %v129, 0
    %v140 = vsel %vm132, %v130, 0
    %v143 = vsel %vm132, %v131, 0
    %145 = vmatprep.subr.mxu0 0.0
    %146 = vmatpush1.msra.mxu0 %v87
    %147 = vmatprep.subr.mxu0 0.0
    %148 = vmatpush1.msra.mxu0 %v88
    %149 = vmatprep.subr.mxu0 0.0
    %150 = vmatpush1.msra.mxu0 %v89
    %151 = vmatprep.subr.mxu0 0.0
    %152 = vmatpush1.msra.mxu0 %v90
    %153 = vmatprep.subr.mxu0 0.0
    %154 = vmatpush1.msra.mxu0 0.0
    %155 = vmatprep.subr.mxu0 0.0
    %156 = vmatpush1.msra.mxu0 0.0
    %157 = vmatprep.subr.mxu0 0.0
    %158 = vmatpush1.msra.mxu0 0.0
    %159 = vmatprep.subr.mxu0 0.0
    %160 = vmatpush1.msra.mxu0 0.0
    %161 = vmatprep.subr.mxu0 0.0
    %162 = vmatpush1.msra.mxu0 0.0
    %163 = vmatprep.subr.mxu0 0.0
    %164 = vmatpush1.msra.mxu0 0.0
    %165 = vmatprep.subr.mxu0 0.0
    %166 = vmatpush1.msra.mxu0 0.0
    %167 = vmatprep.subr.mxu0 0.0
    %168 = vmatpush1.msra.mxu0 0.0
    %169 = vmatprep.subr.mxu0 0.0
    %170 = vmatpush1.msra.mxu0 0.0
    %171 = vmatprep.subr.mxu0 0.0
    %172 = vmatpush1.msra.mxu0 0.0
    %173 = vmatprep.subr.mxu0 0.0
    %174 = vmatpush1.msra.mxu0 0.0
    %175 = vmatprep.subr.mxu0 0.0
    %176 = vmatpush1.msra.mxu0 0.0
    %177 = vmatprep.subr.mxu0 0.0
    %178 = vmatpush1.msra.mxu0 0.0
    %179 = vmatprep.subr.mxu0 0.0
    %180 = vmatpush1.msra.mxu0 0.0
    %181 = vmatprep.subr.mxu0 0.0
    %182 = vmatpush1.msra.mxu0 0.0
    %183 = vmatprep.subr.mxu0 0.0
    %184 = vmatpush1.msra.mxu0 0.0
    %185 = vmatprep.subr.mxu0 0.0
    %186 = vmatpush1.msra.mxu0 0.0
    %187 = vmatprep.subr.mxu0 0.0
    %188 = vmatpush1.msra.mxu0 0.0
    %189 = vmatprep.subr.mxu0 0.0
    %190 = vmatpush1.msra.mxu0 0.0
    %191 = vmatprep.subr.mxu0 0.0
    %192 = vmatpush1.msra.mxu0 0.0
    %193 = vmatprep.subr.mxu0 0.0
    %194 = vmatpush1.msra.mxu0 0.0
    %195 = vmatprep.subr.mxu0 0.0
    %196 = vmatpush1.msra.mxu0 0.0
    %197 = vmatprep.subr.mxu0 0.0
    %198 = vmatpush1.msra.mxu0 0.0
    %199 = vmatprep.subr.mxu0 0.0
    %200 = vmatpush1.msra.mxu0 0.0
    %201 = vmatprep.subr.mxu0 0.0
    %202 = vmatpush1.msra.mxu0 0.0
    %203 = vmatprep.subr.mxu0 0.0
    %204 = vmatpush1.msra.mxu0 0.0
    %205 = vmatprep.subr.mxu0 0.0
    %206 = vmatpush1.msra.mxu0 0.0
    %207 = vmatprep.subr.mxu0 0.0
    %208 = vmatpush1.msra.mxu0 0.0
    %209 = vmatprep.mubr.f32.mxu0 0.0
    %210 = vmatmul.mubr.f32.gmra.mrb[0].mxu0 %v134
    %v211 = vpop.f32.mrb[0].mxu0
    %v212 = vadd.f32 0.0, %v211
    %v213 = vpop.f32.mrb[0].mxu0
    %214 = vmatprep.mubr.f32.mxu0 0.0
    %215 = vmatmul.mubr.f32.gmra.mrb[0].mxu0 %v137
    %v216 = vpop.f32.mrb[0].mxu0
    %v217 = vadd.f32 0.0, %v216
    %v218 = vpop.f32.mrb[0].mxu0
    %219 = vmatprep.mubr.f32.mxu0 0.0
    %220 = vmatmul.mubr.f32.gmra.mrb[0].mxu0 %v140
    %v221 = vpop.f32.mrb[0].mxu0
    %v222 = vadd.f32 0.0, %v221
    %v223 = vpop.f32.mrb[0].mxu0
    %224 = vmatprep.mubr.f32.mxu0 0.0
    %225 = vmatmul.mubr.f32.gmra.mrb[0].mxu0 %v143
    %v226 = vpop.f32.mrb[0].mxu0
    %v227 = vadd.f32 0.0, %v226
    %v228 = vpop.f32.mrb[0].mxu0
    %229 = vdwg.mxu0
    %v231 = vsel %vm132, %v123, 0
    %v234 = vsel %vm132, %v124, 0
    %v237 = vsel %vm132, %v125, 0
    %v240 = vsel %vm132, %v126, 0
    %242 = vmatprep.subr.mxu0 0.0
    %243 = vmatpush1.msra.mxu0 %v103
    %244 = vmatprep.subr.mxu0 0.0
    %245 = vmatpush1.msra.mxu0 %v104
    %246 = vmatprep.subr.mxu0 0.0
    %247 = vmatpush1.msra.mxu0 %v105
    %248 = vmatprep.subr.mxu0 0.0
    %249 = vmatpush1.msra.mxu0 %v106
    %250 = vmatprep.subr.mxu0 0.0
    %251 = vmatpush1.msra.mxu0 0.0
    %252 = vmatprep.subr.mxu0 0.0
    %253 = vmatpush1.msra.mxu0 0.0
    %254 = vmatprep.subr.mxu0 0.0
    %255 = vmatpush1.msra.mxu0 0.0
    %256 = vmatprep.subr.mxu0 0.0
    %257 = vmatpush1.msra.mxu0 0.0
    %258 = vmatprep.subr.mxu0 0.0
    %259 = vmatpush1.msra.mxu0 0.0
    %260 = vmatprep.subr.mxu0 0.0
    %261 = vmatpush1.msra.mxu0 0.0
    %262 = vmatprep.subr.mxu0 0.0
    %263 = vmatpush1.msra.mxu0 0.0
    %264 = vmatprep.subr.mxu0 0.0
    %265 = vmatpush1.msra.mxu0 0.0
    %266 = vmatprep.subr.mxu0 0.0
    %267 = vmatpush1.msra.mxu0 0.0
    %268 = vmatprep.subr.mxu0 0.0
    %269 = vmatpush1.msra.mxu0 0.0
    %270 = vmatprep.subr.mxu0 0.0
    %271 = vmatpush1.msra.mxu0 0.0
    %272 = vmatprep.subr.mxu0 0.0
    %273 = vmatpush1.msra.mxu0 0.0
    %274 = vmatprep.subr.mxu0 0.0
    %275 = vmatpush1.msra.mxu0 0.0
    %276 = vmatprep.subr.mxu0 0.0
    %277 = vmatpush1.msra.mxu0 0.0
    %278 = vmatprep.subr.mxu0 0.0
    %279 = vmatpush1.msra.mxu0 0.0
    %280 = vmatprep.subr.mxu0 0.0
    %281 = vmatpush1.msra.mxu0 0.0
    %282 = vmatprep.subr.mxu0 0.0
    %283 = vmatpush1.msra.mxu0 0.0
    %284 = vmatprep.subr.mxu0 0.0
    %285 = vmatpush1.msra.mxu0 0.0
    %286 = vmatprep.subr.mxu0 0.0
    %287 = vmatpush1.msra.mxu0 0.0
    %288 = vmatprep.subr.mxu0 0.0
    %289 = vmatpush1.msra.mxu0 0.0
    %290 = vmatprep.subr.mxu0 0.0
    %291 = vmatpush1.msra.mxu0 0.0
    %292 = vmatprep.subr.mxu0 0.0
    %293 = vmatpush1.msra.mxu0 0.0
    %294 = vmatprep.subr.mxu0 0.0
    %295 = vmatpush1.msra.mxu0 0.0
    %296 = vmatprep.subr.mxu0 0.0
    %297 = vmatpush1.msra.mxu0 0.0
    %298 = vmatprep.subr.mxu0 0.0
    %299 = vmatpush1.msra.mxu0 0.0
    %300 = vmatprep.subr.mxu0 0.0
    %301 = vmatpush1.msra.mxu0 0.0
    %302 = vmatprep.subr.mxu0 0.0
    %303 = vmatpush1.msra.mxu0 0.0
    %304 = vmatprep.subr.mxu0 0.0
    %305 = vmatpush1.msra.mxu0 0.0
    %306 = vmatprep.mubr.f32.mxu0 0.0
    %307 = vmatmul.mubr.f32.gmra.mrb[0].mxu0 %v231
    %v308 = vpop.f32.mrb[0].mxu0
    %v309 = vadd.f32 %v212, %v308
    %v310 = vpop.f32.mrb[0].mxu0
    %311 = vmatprep.mubr.f32.mxu0 0.0
    %312 = vmatmul.mubr.f32.gmra.mrb[0].mxu0 %v234
    %v313 = vpop.f32.mrb[0].mxu0
    %v314 = vadd.f32 %v217, %v313
    %v315 = vpop.f32.mrb[0].mxu0
    %316 = vmatprep.mubr.f32.mxu0 0.0
    %317 = vmatmul.mubr.f32.gmra.mrb[0].mxu0 %v237
    %v318 = vpop.f32.mrb[0].mxu0
    %v319 = vadd.f32 %v222, %v318
    %v320 = vpop.f32.mrb[0].mxu0
    %321 = vmatprep.mubr.f32.mxu0 0.0
    %322 = vmatmul.mubr.f32.gmra.mrb[0].mxu0 %v240
    %v323 = vpop.f32.mrb[0].mxu0
    %v324 = vadd.f32 %v227, %v323
    %v325 = vpop.f32.mrb[0].mxu0
    %326 = vdwg.mxu0
    %s327 = scalar_lea.vmem [#allocation2], 64
    %v328 = vld [vmem:[%s327] sm:$0xff]
    %v329 = vld [vmem:[%s327 + $0x8] sm:$0xff]
    %v330 = vld [vmem:[%s327 + $0x10] sm:$0xff]
    %v331 = vld [vmem:[%s327 + $0x18] sm:$0xff]
    %v333 = vsel %vm132, %v328, 0
    %v336 = vsel %vm132, %v329, 0
    %v339 = vsel %vm132, %v330, 0
    %v342 = vsel %vm132, %v331, 0
    %344 = vmatprep.subr.mxu0 0.0
    %345 = vmatpush1.msra.mxu0 %v119
    %346 = vmatprep.subr.mxu0 0.0
    %347 = vmatpush1.msra.mxu0 %v120
    %348 = vmatprep.subr.mxu0 0.0
    %349 = vmatpush1.msra.mxu0 %v121
    %350 = vmatprep.subr.mxu0 0.0
    %351 = vmatpush1.msra.mxu0 %v122
    %352 = vmatprep.subr.mxu0 0.0
    %353 = vmatpush1.msra.mxu0 0.0
    %354 = vmatprep.subr.mxu0 0.0
    %355 = vmatpush1.msra.mxu0 0.0
    %356 = vmatprep.subr.mxu0 0.0
    %357 = vmatpush1.msra.mxu0 0.0
    %358 = vmatprep.subr.mxu0 0.0
    %359 = vmatpush1.msra.mxu0 0.0
    %360 = vmatprep.subr.mxu0 0.0
    %361 = vmatpush1.msra.mxu0 0.0
    %362 = vmatprep.subr.mxu0 0.0
    %363 = vmatpush1.msra.mxu0 0.0
    %364 = vmatprep.subr.mxu0 0.0
    %365 = vmatpush1.msra.mxu0 0.0
    %366 = vmatprep.subr.mxu0 0.0
    %367 = vmatpush1.msra.mxu0 0.0
    %368 = vmatprep.subr.mxu0 0.0
    %369 = vmatpush1.msra.mxu0 0.0
    %370 = vmatprep.subr.mxu0 0.0
    %371 = vmatpush1.msra.mxu0 0.0
    %372 = vmatprep.subr.mxu0 0.0
    %373 = vmatpush1.msra.mxu0 0.0
    %374 = vmatprep.subr.mxu0 0.0
    %375 = vmatpush1.msra.mxu0 0.0
    %376 = vmatprep.subr.mxu0 0.0
    %377 = vmatpush1.msra.mxu0 0.0
    %378 = vmatprep.subr.mxu0 0.0
    %379 = vmatpush1.msra.mxu0 0.0
    %380 = vmatprep.subr.mxu0 0.0
    %381 = vmatpush1.msra.mxu0 0.0
    %382 = vmatprep.subr.mxu0 0.0
    %383 = vmatpush1.msra.mxu0 0.0
    %384 = vmatprep.subr.mxu0 0.0
    %385 = vmatpush1.msra.mxu0 0.0
    %386 = vmatprep.subr.mxu0 0.0
    %387 = vmatpush1.msra.mxu0 0.0
    %388 = vmatprep.subr.mxu0 0.0
    %389 = vmatpush1.msra.mxu0 0.0
    %390 = vmatprep.subr.mxu0 0.0
    %391 = vmatpush1.msra.mxu0 0.0
    %392 = vmatprep.subr.mxu0 0.0
    %393 = vmatpush1.msra.mxu0 0.0
    %394 = vmatprep.subr.mxu0 0.0
    %395 = vmatpush1.msra.mxu0 0.0
    %396 = vmatprep.subr.mxu0 0.0
    %397 = vmatpush1.msra.mxu0 0.0
    %398 = vmatprep.subr.mxu0 0.0
    %399 = vmatpush1.msra.mxu0 0.0
    %400 = vmatprep.subr.mxu0 0.0
    %401 = vmatpush1.msra.mxu0 0.0
    %402 = vmatprep.subr.mxu0 0.0
    %403 = vmatpush1.msra.mxu0 0.0
    %404 = vmatprep.subr.mxu0 0.0
    %405 = vmatpush1.msra.mxu0 0.0
    %406 = vmatprep.subr.mxu0 0.0
    %407 = vmatpush1.msra.mxu0 0.0
    %408 = vmatprep.mubr.f32.mxu0 0.0
    %409 = vmatmul.mubr.f32.gmra.mrb[0].mxu0 %v333
    %v410 = vpop.f32.mrb[0].mxu0
    %v411 = vadd.f32 0.0, %v410
    %v412 = vpop.f32.mrb[0].mxu0
    %413 = vmatprep.mubr.f32.mxu0 0.0
    %414 = vmatmul.mubr.f32.gmra.mrb[0].mxu0 %v336
    %v415 = vpop.f32.mrb[0].mxu0
    %v416 = vadd.f32 0.0, %v415
    %v417 = vpop.f32.mrb[0].mxu0
    %418 = vmatprep.mubr.f32.mxu0 0.0
    %419 = vmatmul.mubr.f32.gmra.mrb[0].mxu0 %v339
    %v420 = vpop.f32.mrb[0].mxu0
    %v421 = vadd.f32 0.0, %v420
    %v422 = vpop.f32.mrb[0].mxu0
    %423 = vmatprep.mubr.f32.mxu0 0.0
    %424 = vmatmul.mubr.f32.gmra.mrb[0].mxu0 %v342
    %v425 = vpop.f32.mrb[0].mxu0
    %v426 = vadd.f32 0.0, %v425
    %v427 = vpop.f32.mrb[0].mxu0
    %428 = vdwg.mxu0
    %v429 = vadd.f32 %v309, %v411
    %v430 = vadd.f32 %v314, %v416
    %v431 = vadd.f32 %v319, %v421
    %v432 = vadd.f32 %v324, %v426
    %433 = vset.pattern.permute.xlu0 2
    %434 = vperm.xlu0 %433, %v37
    %v435 = vpop.permute.xlu0 %434
    %437 = vset.pattern.permute.xlu0 2
    %438 = vperm.xlu0 %437, %v38
    %v439 = vpop.permute.xlu0 %438
    %441 = vset.pattern.permute.xlu0 2
    %442 = vperm.xlu0 %441, %v39
    %v443 = vpop.permute.xlu0 %442
    %445 = vset.pattern.permute.xlu0 2
    %446 = vperm.xlu0 %445, %v40
    %v447 = vpop.permute.xlu0 %446
    %v449 = vadd.f32 %v429, %v435
    %v450 = vadd.f32 %v430, %v439
    %v451 = vadd.f32 %v431, %v443
    %v452 = vadd.f32 %v432, %v447
    %v453 = vld [vmem:[%s2] sm:$0xff]
    %v455 = vsel %vm132, %v453, 0
    %457 = vmatprep.subr.mxu0 0.0
    %458 = vmatpush1.msra.mxu0 %v449
    %459 = vmatprep.subr.mxu0 0.0
    %460 = vmatpush1.msra.mxu0 %v450
    %461 = vmatprep.subr.mxu0 0.0
    %462 = vmatpush1.msra.mxu0 %v451
    %463 = vmatprep.subr.mxu0 0.0
    %464 = vmatpush1.msra.mxu0 %v452
    %465 = vmatprep.subr.mxu0 0.0
    %466 = vmatpush1.msra.mxu0 0.0
    %467 = vmatprep.subr.mxu0 0.0
    %468 = vmatpush1.msra.mxu0 0.0
    %469 = vmatprep.subr.mxu0 0.0
    %470 = vmatpush1.msra.mxu0 0.0
    %471 = vmatprep.subr.mxu0 0.0
    %472 = vmatpush1.msra.mxu0 0.0
    %473 = vmatprep.subr.mxu0 0.0
    %474 = vmatpush1.msra.mxu0 0.0
    %475 = vmatprep.subr.mxu0 0.0
    %476 = vmatpush1.msra.mxu0 0.0
    %477 = vmatprep.subr.mxu0 0.0
    %478 = vmatpush1.msra.mxu0 0.0
    %479 = vmatprep.subr.mxu0 0.0
    %480 = vmatpush1.msra.mxu0 0.0
    %481 = vmatprep.subr.mxu0 0.0
    %482 = vmatpush1.msra.mxu0 0.0
    %483 = vmatprep.subr.mxu0 0.0
    %484 = vmatpush1.msra.mxu0 0.0
    %485 = vmatprep.subr.mxu0 0.0
    %486 = vmatpush1.msra.mxu0 0.0
    %487 = vmatprep.subr.mxu0 0.0
    %488 = vmatpush1.msra.mxu0 0.0
    %489 = vmatprep.subr.mxu0 0.0
    %490 = vmatpush1.msra.mxu0 0.0
    %491 = vmatprep.subr.mxu0 0.0
    %492 = vmatpush1.msra.mxu0 0.0
    %493 = vmatprep.subr.mxu0 0.0
    %494 = vmatpush1.msra.mxu0 0.0
    %495 = vmatprep.subr.mxu0 0.0
    %496 = vmatpush1.msra.mxu0 0.0
    %497 = vmatprep.subr.mxu0 0.0
    %498 = vmatpush1.msra.mxu0 0.0
    %499 = vmatprep.subr.mxu0 0.0
    %500 = vmatpush1.msra.mxu0 0.0
    %501 = vmatprep.subr.mxu0 0.0
    %502 = vmatpush1.msra.mxu0 0.0
    %503 = vmatprep.subr.mxu0 0.0
    %504 = vmatpush1.msra.mxu0 0.0
    %505 = vmatprep.subr.mxu0 0.0
    %506 = vmatpush1.msra.mxu0 0.0
    %507 = vmatprep.subr.mxu0 0.0
    %508 = vmatpush1.msra.mxu0 0.0
    %509 = vmatprep.subr.mxu0 0.0
    %510 = vmatpush1.msra.mxu0 0.0
    %511 = vmatprep.subr.mxu0 0.0
    %512 = vmatpush1.msra.mxu0 0.0
    %513 = vmatprep.subr.mxu0 0.0
    %514 = vmatpush1.msra.mxu0 0.0
    %515 = vmatprep.subr.mxu0 0.0
    %516 = vmatpush1.msra.mxu0 0.0
    %517 = vmatprep.subr.mxu0 0.0
    %518 = vmatpush1.msra.mxu0 0.0
    %519 = vmatprep.subr.mxu0 0.0
    %520 = vmatpush1.msra.mxu0 0.0
    %521 = vmatprep.mubr.f32.mxu0 0.0
    %522 = vmatmul.mubr.f32.gmra.mrb[0].mxu0 %v455
    %v523 = vpop.f32.mrb[0].mxu0
    %v524 = vadd.f32 0.0, %v523
    %v525 = vpop.f32.mrb[0].mxu0
    %526 = vdwg.mxu0
    %527 = vset.pattern.permute.xlu0 3
    %528 = vperm.xlu0 %527, %v37
    %v529 = vpop.permute.xlu0 %528
    %v532 = vrot.slane %v524, 2
    %v534 = vadd.f32 %v529, %v532
    %535 = vrot.lane.b32.xlu0 %v524, 2
    %v536 = vpop.permute.xlu0 %535
    %v538 = vrot.slane %v36, 1
    %v540 = vmul.f32 %v536, %v538
    %v541 = vadd.f32 %v534, %v540
    %v542 = vrot.slane %v524, 1
    %544 = vrot.lane.b32.xlu0 %v542, 1
    %v545 = vpop.permute.xlu0 %544
    %v546 = vmul.f32 %v545, %v36
    %v547 = vadd.f32 %v541, %v546
    %v548 = vrot.slane %v524, 3
    %550 = vrot.lane.b32.xlu0 %v548, 127
    %v551 = vpop.permute.xlu0 %550
    %v552 = vrot.slane %v36, 2
    %v554 = vmul.f32 %v551, %v552
    %v555 = vadd.f32 %v547, %v554
    %v556 = vrot.slane %v524, 4
    %558 = vrot.lane.b32.xlu0 %v556, 126
    %v559 = vpop.permute.xlu0 %558
    %v560 = vrot.slane %v36, 3
    %v562 = vmul.f32 %v559, %v560
    %v563 = vadd.f32 %v555, %v562
    %564 = vset.pattern.permute.xlu0 4
    %565 = vperm.xlu0 %564, %v37
    %v566 = vpop.permute.xlu0 %565
    %v568 = vmul.f32 %v566, %v35
    %569 = vset.pattern.permute.xlu0 5
    %570 = vperm.xlu0 %569, %v37
    %v571 = vpop.permute.xlu0 %570
    %v573 = vadd.f32 %v568, %v571
    %v575 = vrot.slane %v563, 4
    %v577 = vmul.f32 %v36, %v575
    %v578 = vsub.f32 1.0, %v36
    %v580 = vrot.slane %v573, 4
    %v582 = vmul.f32 %v578, %v580
    %v583 = vadd.f32 %v577, %v582
    %584 = vst [vmem:[#allocation5 - $0x4] sm:$0x10] %v583
    // Predicated region
    $region26: #{tpu_custom_call.1} parent=1 // pred_check
      _
    $region27: #{tpu_custom_call.1} parent=1 // pred_check_branch
      %586 = sbr.rel (0) target = $region29
    $region28: #{tpu_custom_call.1} parent=1 // pred_region
      %s588 = ssub.s32 16, 16
      %589 = vsyncadd [#allocation4], %s588
      %s591 = sshll.u32 [#allocation5], 4
      %s592 = int_to_ptr.vmem [resolvable:$true] %s591
      %594 = dma.vmem_to_hbm [thread:$0]  %s592, 16, %s5, [#allocation4]
    $region29: #{tpu_custom_call.1} parent=1 // pred_fallthru
      _
    // Predicated region
    $region30: #{tpu_custom_call.1} parent=1 // pred_check
      _
    $region31: #{tpu_custom_call.1} parent=1 // pred_check_branch
      %596 = sbr.rel (0) target = $region33
    $region32: #{tpu_custom_call.1} parent=1 // pred_region
      %597 = dma.done [#allocation4], 16
    $region33: #{tpu_custom_call.1} parent=1 // pred_fallthru
      _
    %598 = vsyncpa [#allocation3], 1
    %599 = vsyncpa [#allocation4], 1

</llo_original>
